<compile_context>
chip_gen: v7x
topology: tpu7x:2x2x1
jax: 0.10.0
libtpu: 0.0.40
codegen_flags: <defaults>
</compile_context>

<pallas_src>
import jax
import jax.numpy as jnp
from jax import lax
from jax.experimental import pallas as pl
from jax.experimental.pallas import tpu as pltpu


# ---------------------------------------------------------------------------
# Kernels
# ---------------------------------------------------------------------------

def _sa_flash_kernel(xq_ref, xk_ref, v_ref, wqk_ref, wcol_ref, o_ref,
                     qp_sc, m_sc, l_sc, acc_sc):
    """One (batch, query-tile, kv-tile) flash-attention grid step.

    xq_ref : (1, C, TQ) f32   query pixels (columns); also the residual input
    xk_ref : (1, C, TK) mm    key pixels (columns), matmul dtype
    v_ref  : (1, C, TK) mm    precomputed V = Wv X + bv, matmul dtype
    wqk_ref: (C, C) f32       Wq^T @ Wk
    wcol_ref: (1, C) f32      Wk^T @ bq (per-key additive score bias)
    o_ref  : (1, C, TQ)       output tile (pixel axis lane-dense)
    qp_sc  : (TQ, C) mm       cached query projection (filled at ki == 0)
    m_sc, l_sc : (TQ, 128) f32  lane-replicated online-softmax stats
    acc_sc : (TQ, C) f32      output accumulator
    """
    ki = pl.program_id(2)
    C = acc_sc.shape[1]
    stats_lanes = m_sc.shape[1]

    @pl.when(ki == 0)
    def _init():
        m_sc[...] = jnp.full_like(m_sc, -jnp.inf)
        l_sc[...] = jnp.zeros_like(l_sc)
        acc_sc[...] = jnp.zeros_like(acc_sc)
        # Query projection hoisted off the per-KV-step path (once per q tile).
        # The folded per-key bias row is added here, so the score matmul needs
        # no separate bias term at all.
        xq = xq_ref[0]                                             # (C, TQ)
        qp = jnp.dot(xq.T, wqk_ref[...],
                     preferred_element_type=jnp.float32)           # (TQ, C)
        qp_sc[...] = (qp + wcol_ref[...]).astype(qp_sc.dtype)

    xk = xk_ref[0]                                                 # (C, TK)
    v = v_ref[0]                                                   # (C, TK)
    qp = qp_sc[...]                                                # (TQ, C)

    # Scores: full-C contraction on the MXU (bf16 operands / f32 accumulate
    # when matmul_dtype == bfloat16).
    e = jnp.dot(qp, xk, preferred_element_type=jnp.float32)        # (TQ, TK)

    # Online softmax over the KV axis; stats kept lane-replicated so the
    # rescale bookkeeping stays on the VPU instead of 1-lane columns.
    m_prev = m_sc[...]                                             # (TQ, 128)
    m_next = jnp.maximum(m_prev, jnp.max(e, axis=-1, keepdims=True))
    alpha = jnp.exp(m_prev - m_next)                               # (TQ, 128)
    p = jnp.exp(e - m_next[:, :1])                                 # (TQ, TK) f32
    l_sc[...] = alpha * l_sc[...] + jnp.sum(p, axis=-1, keepdims=True)
    # attn @ V with the transpose folded into the contraction (NT form).
    pv = lax.dot_general(p.astype(v.dtype), v, (((1,), (1,)), ((), ())),
                         preferred_element_type=jnp.float32)       # (TQ, C)
    alpha_c = alpha[:, :C] if C <= stats_lanes else alpha[:, :1]
    acc_sc[...] = acc_sc[...] * alpha_c + pv
    m_sc[...] = m_next

    @pl.when(ki == pl.num_programs(2) - 1)
    def _finalize():
        inv_l = pl.reciprocal(l_sc[...], approx=False)             # (TQ, 128)
        inv_c = inv_l[:, :C] if C <= stats_lanes else inv_l[:, :1]
        out_t = acc_sc[...] * inv_c                                # (TQ, C)
        # Residual add + store with the pixel axis on lanes (lane-dense).
        o_ref[0] = (out_t.T + xq_ref[0]).astype(o_ref.dtype)       # (C, TQ)


def _sa_dense_kernel(xq_ref, xk_ref, v_ref, wqk_ref, wcol_ref, o_ref):
    """Single-KV-tile fast path (nk == 1): plain row softmax, no online state."""
    xq = xq_ref[0]                                                 # (C, TQ) f32
    xk = xk_ref[0]                                                 # (C, N)  mm
    v = v_ref[0]                                                   # (C, N)  mm
    qp = (jnp.dot(xq.T, wqk_ref[...], preferred_element_type=jnp.float32)
          + wcol_ref[...]).astype(xk.dtype)                        # (TQ, C)
    e = jnp.dot(qp, xk, preferred_element_type=jnp.float32)        # (TQ, N)
    m = jnp.max(e, axis=-1, keepdims=True)
    p = jnp.exp(e - m)                                             # (TQ, N) f32
    l = jnp.sum(p, axis=-1, keepdims=True)
    pv = lax.dot_general(p.astype(v.dtype), v, (((1,), (1,)), ((), ())),
                         preferred_element_type=jnp.float32)       # (TQ, C)
    out_t = pv * pl.reciprocal(l, approx=False)                    # (TQ, C)
    o_ref[0] = (out_t.T + xq).astype(o_ref.dtype)                  # (C, TQ)


# ---------------------------------------------------------------------------
# Host wrapper
# ---------------------------------------------------------------------------

def _pick_tile(n, target):
    """Largest legal tile: full n, or a multiple of 128 dividing n, <= target."""
    if n <= target:
        return n
    t = (target // 128) * 128
    while t >= 128:
        if n % t == 0:
            return t
        t -= 128
    # No 128-multiple divides n: fall back to the full extent (always legal).
    # TODO(synk): pad N (or add Element/BoundedSlice tail handling) so a
    # ragged N does not force a full-extent tile and blow VMEM for large N.
    return n


def _vmem_limit(estimate_bytes):
    """2x footprint + fixed headroom, capped to the v7x per-core VMEM."""
    return int(min(2 * estimate_bytes + (8 << 20), 64 << 20))


def self_attention_pallas(x_nchw, wq, bq, wk, bk, wv, bv,
                          *, tile_q=512, tile_kv=512,
                          matmul_dtype=jnp.bfloat16):
    """FURENet SelfAttention forward.

    x_nchw: (B, C, H, W) float32.  PyTorch-style 1x1-conv params:
      wq/wk: (C//8, C), wv: (C, C), biases 1-D.

    matmul_dtype selects the MXU operand dtype for the two O(N^2 C) matmuls
    (accumulation is always f32): bfloat16 (default) is ~3-4x faster on
    v6e/v7x; pass jnp.float32 for a 1e-4-exact match to the reference.
    On v5e, a larger tile_q (e.g. 1024) further cuts KV HBM re-reads.
    """
    B, C, H, W = x_nchw.shape
    N = H * W
    f32 = jnp.float32
    mm_size = jnp.dtype(matmul_dtype).itemsize

    # NCHW -> (B, C, N): free reshape, no transpose / extra HBM pass.
    x_bcn = x_nchw.reshape(B, C, N)

    # Host-side weight folding (tiny, O(C^2)).
    wqk = wq.astype(f32).T @ wk.astype(f32)                    # (C, C) = Wq^T Wk
    wcol = (wk.astype(f32).T @ bq.astype(f32)).reshape(1, C)   # per-key bias row

    # Key-side stream in the matmul dtype (halves re-read HBM traffic in bf16).
    k_bcn = x_bcn.astype(matmul_dtype)
    # Value projection precomputed ONCE per batch (was recomputed per
    # (q-tile, kv-tile) inside the kernel): one extra (B, C, N) stream instead
    # of 2*C^2*TK MXU flops per inner step.
    v_bcn = (jnp.einsum('oc,bcn->bon', wv.astype(f32), x_bcn.astype(f32))
             + bv.astype(f32)[None, :, None]).astype(matmul_dtype)

    TQ = _pick_tile(N, tile_q)
    # v7x runs 2 TensorCores over the "parallel" grid axes: give them >= 2
    # blocks along (B, nq) when the problem allows it.
    if B * (N // TQ) < 2 and N % 256 == 0:
        TQ = _pick_tile(N, N // 2)
    TK = _pick_tile(N, tile_kv)
    nq, nk = N // TQ, N // TK

    flops = int(B * (2 * N * C * C + 4 * N * N * C))
    transcendentals = int(B * N * N)
    bytes_accessed = int(B * C * N * (8 + 2 * mm_size * nq) + 8 * C * C)

    if nk == 1:
        # ------------------ dense fast path (single KV tile) ---------------
        vmem_est = (2 * C * TQ * 4              # xq (double-buffered)
                    + 2 * C * N * mm_size       # keys
                    + 2 * C * N * mm_size       # values
                    + 2 * C * TQ * 4            # out
                    + 2 * (C * C + C) * 4       # wqk + wcol
                    + 3 * TQ * N * 4)           # e / p temporaries
        out_bcn = pl.pallas_call(
            _sa_dense_kernel,
            out_shape=jax.ShapeDtypeStruct((B, C, N), x_nchw.dtype),
            grid_spec=pltpu.PrefetchScalarGridSpec(
                num_scalar_prefetch=0,
                grid=(B, nq),
                in_specs=[
                    pl.BlockSpec((1, C, TQ), lambda b, qi: (b, 0, qi)),
                    pl.BlockSpec((1, C, N), lambda b, qi: (b, 0, 0)),
                    pl.BlockSpec((1, C, N), lambda b, qi: (b, 0, 0)),
                    pl.BlockSpec((C, C), lambda b, qi: (0, 0)),
                    pl.BlockSpec((1, C), lambda b, qi: (0, 0)),
                ],
                out_specs=pl.BlockSpec((1, C, TQ), lambda b, qi: (b, 0, qi)),
            ),
            compiler_params=pltpu.CompilerParams(
                dimension_semantics=("parallel", "parallel"),
                vmem_limit_bytes=_vmem_limit(vmem_est),
            ),
            cost_estimate=pl.CostEstimate(
                flops=flops, transcendentals=transcendentals,
                bytes_accessed=bytes_accessed),
        )(x_bcn, k_bcn, v_bcn, wqk, wcol)
    else:
        # ------------------ flash (tiled online-softmax) path --------------
        vmem_est = (2 * C * TQ * 4              # xq (double-buffered)
                    + 2 * C * TK * mm_size      # keys
                    + 2 * C * TK * mm_size      # values
                    + 2 * C * TQ * 4            # out
                    + 2 * (C * C + C) * 4       # wqk + wcol
                    + TQ * C * mm_size          # qproj scratch
                    + 2 * TQ * 128 * 4          # m, l (lane-replicated)
                    + TQ * C * 4                # acc
                    + 3 * TQ * TK * 4)          # e / p temporaries
        out_bcn = pl.pallas_call(
            _sa_flash_kernel,
            out_shape=jax.ShapeDtypeStruct((B, C, N), x_nchw.dtype),
            grid_spec=pltpu.PrefetchScalarGridSpec(
                num_scalar_prefetch=0,
                grid=(B, nq, nk),
                in_specs=[
                    pl.BlockSpec((1, C, TQ), lambda b, qi, ki: (b, 0, qi)),
                    pl.BlockSpec((1, C, TK), lambda b, qi, ki: (b, 0, ki)),
                    pl.BlockSpec((1, C, TK), lambda b, qi, ki: (b, 0, ki)),
                    pl.BlockSpec((C, C), lambda b, qi, ki: (0, 0)),
                    pl.BlockSpec((1, C), lambda b, qi, ki: (0, 0)),
                ],
                out_specs=pl.BlockSpec((1, C, TQ), lambda b, qi, ki: (b, 0, qi)),
                scratch_shapes=[
                    pltpu.VMEM((TQ, C), matmul_dtype),    # cached query proj
                    pltpu.VMEM((TQ, 128), jnp.float32),   # running max
                    pltpu.VMEM((TQ, 128), jnp.float32),   # running sum
                    pltpu.VMEM((TQ, C), jnp.float32),     # output accumulator
                ],
            ),
            compiler_params=pltpu.CompilerParams(
                dimension_semantics=("parallel", "parallel", "arbitrary"),
                vmem_limit_bytes=_vmem_limit(vmem_est),
            ),
            cost_estimate=pl.CostEstimate(
                flops=flops, transcendentals=transcendentals,
                bytes_accessed=bytes_accessed),
        )(x_bcn, k_bcn, v_bcn, wqk, wcol)

    # (B, C, N) -> (B, C, H, W): free reshape.
    return out_bcn.reshape(B, C, H, W)


# ---------------------------------------------------------------------------
# Pure-JAX reference (mirrors the PyTorch forward, NCHW)
# ---------------------------------------------------------------------------

def self_attention_ref(x, wq, bq, wk, bk, wv, bv):
    B, C, H, W = x.shape
    N = H * W
    q = jnp.einsum('oc,bchw->bohw', wq, x) + bq[None, :, None, None]
    k = jnp.einsum('oc,bchw->bohw', wk, x) + bk[None, :, None, None]
    v = jnp.einsum('oc,bchw->bohw', wv, x) + bv[None, :, None, None]
    q = q.reshape(B, -1, N).transpose(0, 2, 1)             # (B, N, C//8)
    k = k.reshape(B, -1, N).transpose(0, 2, 1)             # (B, N, C//8)
    v = v.reshape(B, C, N)                                 # (B, C, N)
    energy = jnp.einsum('bic,bjc->bij', q, k)              # (B, N, N)
    attn = jax.nn.softmax(energy, axis=-1)
    out = jnp.einsum('bcj,bij->bci', v, attn)              # bmm(value, attn^T)
    return out.reshape(B, C, H, W) + x


if __name__ == "__main__":
    key = jax.random.PRNGKey(0)
    B, C, H, W = 2, 32, 8, 8          # in_channels=32 -> query/key channels = 4
    C8 = C // 8

    k_x, k_wq, k_bq, k_wk, k_bk, k_wv, k_bv = jax.random.split(key, 7)
    x = jax.random.normal(k_x, (B, C, H, W), dtype=jnp.float32)
    wq = jax.random.normal(k_wq, (C8, C), dtype=jnp.float32) * 0.1
    bq = jax.random.normal(k_bq, (C8,), dtype=jnp.float32) * 0.1
    wk = jax.random.normal(k_wk, (C8, C), dtype=jnp.float32) * 0.1
    bk = jax.random.normal(k_bk, (C8,), dtype=jnp.float32) * 0.1
    wv = jax.random.normal(k_wv, (C, C), dtype=jnp.float32) * 0.1
    bv = jax.random.normal(k_bv, (C,), dtype=jnp.float32) * 0.1

    ref = self_attention_ref(x, wq, bq, wk, bk, wv, bv)

    # Dense fast path (N = 64 -> single KV tile), f32 matmuls: tight tolerance.
    out_f32 = jax.block_until_ready(
        self_attention_pallas(x, wq, bq, wk, bk, wv, bv,
                              matmul_dtype=jnp.float32))
    assert out_f32.shape == (B, C, H, W)
    assert jnp.allclose(out_f32, ref, atol=1e-4, rtol=1e-4), "dense f32 mismatch"

    # Dense fast path, default bf16 MXU operands: bf16-level tolerance.
    out_bf16 = jax.block_until_ready(
        self_attention_pallas(x, wq, bq, wk, bk, wv, bv))
    assert jnp.allclose(out_bf16, ref, atol=2e-2, rtol=2e-2), "dense bf16 mismatch"

    # Flash (tiled online-softmax) path: larger spatial extent so nk > 1.
    H2 = W2 = 16                       # N = 256 -> nq = nk = 2 with 128 tiles
    x2 = jax.random.normal(k_x, (B, C, H2, W2), dtype=jnp.float32)
    ref2 = self_attention_ref(x2, wq, bq, wk, bk, wv, bv)
    out2_f32 = jax.block_until_ready(
        self_attention_pallas(x2, wq, bq, wk, bk, wv, bv,
                              tile_q=128, tile_kv=128,
                              matmul_dtype=jnp.float32))
    assert jnp.allclose(out2_f32, ref2, atol=1e-4, rtol=1e-4), "flash f32 mismatch"
    out2_bf16 = jax.block_until_ready(
        self_attention_pallas(x2, wq, bq, wk, bk, wv, bv,
                              tile_q=128, tile_kv=128))
    assert jnp.allclose(out2_bf16, ref2, atol=2e-2, rtol=2e-2), "flash bf16 mismatch"

    print("KERNEL_OK")
</pallas_src>

<mosaic_0001>
module attributes {stable_mosaic.version = 11 : i64} {
  func.func @_sa_dense_kernel(%arg0: i32, %arg1: i32, %arg2: memref<1x32x64xf32, #tpu.memory_space<vmem>>, %arg3: memref<1x32x64xf32, #tpu.memory_space<vmem>>, %arg4: memref<1x32x64xf32, #tpu.memory_space<vmem>>, %arg5: memref<32x32xf32, #tpu.memory_space<vmem>>, %arg6: memref<1x32xf32, #tpu.memory_space<vmem>>, %arg7: memref<1x32x64xf32, #tpu.memory_space<vmem>>) attributes {dimension_semantics = [#tpu.dimension_semantics<parallel>, #tpu.dimension_semantics<parallel>], iteration_bounds = array<i64: 2, 1>, scalar_prefetch = 0 : i64, scratch_operands = 0 : i64, tpu.core_type = #tpu.core_type<tc>, window_params = [{transform_indices = @transform_0, window_bounds = array<i64: 1, 32, 64>}, {transform_indices = @transform_1, window_bounds = array<i64: 1, 32, 64>}, {transform_indices = @transform_2, window_bounds = array<i64: 1, 32, 64>}, {pipeline_mode = #tpu.pipeline_mode<synchronous>, transform_indices = @transform_3, window_bounds = array<i64: 32, 32>}, {pipeline_mode = #tpu.pipeline_mode<synchronous>, transform_indices = @transform_4, window_bounds = array<i64: 1, 32>}, {transform_indices = @transform_5, window_bounds = array<i64: 1, 32, 64>}]} {
    %c0 = arith.constant 0 : index
    %c0_0 = arith.constant 0 : index
    %c0_1 = arith.constant 0 : index
    %0 = vector.load %arg2[%c0, %c0_0, %c0_1] : memref<1x32x64xf32, #tpu.memory_space<vmem>>, vector<1x32x64xf32>
    %1 = vector.shape_cast %0 : vector<1x32x64xf32> to vector<32x64xf32>
    %c0_2 = arith.constant 0 : index
    %c0_3 = arith.constant 0 : index
    %c0_4 = arith.constant 0 : index
    %2 = vector.load %arg3[%c0_2, %c0_3, %c0_4] : memref<1x32x64xf32, #tpu.memory_space<vmem>>, vector<1x32x64xf32>
    %3 = vector.shape_cast %2 : vector<1x32x64xf32> to vector<32x64xf32>
    %c0_5 = arith.constant 0 : index
    %c0_6 = arith.constant 0 : index
    %c0_7 = arith.constant 0 : index
    %4 = vector.load %arg4[%c0_5, %c0_6, %c0_7] : memref<1x32x64xf32, #tpu.memory_space<vmem>>, vector<1x32x64xf32>
    %5 = vector.shape_cast %4 : vector<1x32x64xf32> to vector<32x64xf32>
    %6 = tpu.transpose %1, [1, 0] : vector<32x64xf32> -> vector<64x32xf32>
    %c0_8 = arith.constant 0 : index
    %c0_9 = arith.constant 0 : index
    %7 = vector.load %arg5[%c0_8, %c0_9] : memref<32x32xf32, #tpu.memory_space<vmem>>, vector<32x32xf32>
    %cst = arith.constant dense<0.000000e+00> : vector<64x32xf32>
    %8 = tpu.matmul %6, %7, %cst {dimension_numbers = #tpu.dot_dimension_numbers<[1], [0], [0], [1], [0, 0, 1, 1], [], []>} : vector<64x32xf32>, vector<32x32xf32>, vector<64x32xf32> -> vector<64x32xf32>
    %c0_10 = arith.constant 0 : index
    %c0_11 = arith.constant 0 : index
    %9 = vector.load %arg6[%c0_10, %c0_11] : memref<1x32xf32, #tpu.memory_space<vmem>>, vector<1x32xf32>
    %10 = vector.broadcast %9 : vector<1x32xf32> to vector<64x32xf32>
    %11 = arith.addf %8, %10 : vector<64x32xf32>
    %cst_12 = arith.constant dense<0.000000e+00> : vector<64x64xf32>
    %12 = tpu.matmul %11, %3, %cst_12 {dimension_numbers = #tpu.dot_dimension_numbers<[1], [0], [0], [1], [0, 0, 1, 1], [], []>} : vector<64x32xf32>, vector<32x64xf32>, vector<64x64xf32> -> vector<64x64xf32>
    %cst_13 = arith.constant dense<0xFF800000> : vector<64xf32>
    %13 = vector.multi_reduction <maximumf>, %12, %cst_13 [1] : vector<64x64xf32> to vector<64xf32>
    %14 = vector.shape_cast %13 : vector<64xf32> to vector<64x1xf32>
    %15 = vector.broadcast %14 : vector<64x1xf32> to vector<64x64xf32>
    %16 = arith.subf %12, %15 : vector<64x64xf32>
    %17 = math.exp %16 : vector<64x64xf32>
    %cst_14 = arith.constant dense<0.000000e+00> : vector<64xf32>
    %18 = vector.multi_reduction <add>, %17, %cst_14 [1] : vector<64x64xf32> to vector<64xf32>
    %19 = vector.shape_cast %18 : vector<64xf32> to vector<64x1xf32>
    %cst_15 = arith.constant dense<0.000000e+00> : vector<64x32xf32>
    %20 = tpu.matmul %17, %5, %cst_15 {dimension_numbers = #tpu.dot_dimension_numbers<[1], [1], [0], [0], [0, 0, 1, 0], [], []>} : vector<64x64xf32>, vector<32x64xf32>, vector<64x32xf32> -> vector<64x32xf32>
    %21 = tpu.reciprocal %19 : vector<64x1xf32> -> vector<64x1xf32>
    %22 = vector.broadcast %21 : vector<64x1xf32> to vector<64x32xf32>
    %23 = arith.mulf %20, %22 : vector<64x32xf32>
    %24 = tpu.transpose %23, [1, 0] : vector<64x32xf32> -> vector<32x64xf32>
    %25 = arith.addf %24, %1 : vector<32x64xf32>
    %c0_16 = arith.constant 0 : index
    %c0_17 = arith.constant 0 : index
    %c0_18 = arith.constant 0 : index
    %26 = vector.load %arg7[%c0_16, %c0_17, %c0_18] : memref<1x32x64xf32, #tpu.memory_space<vmem>>, vector<1x32x64xf32>
    %27 = vector.shape_cast %26 : vector<1x32x64xf32> to vector<32x64xf32>
    %28 = vector.shape_cast %25 : vector<32x64xf32> to vector<1x32x64xf32>
    tpu.vector_store %arg7[%c0_16, %c0_17, %c0_18], %28 {strides = array<i32>} : memref<1x32x64xf32, #tpu.memory_space<vmem>>, vector<1x32x64xf32>,
    return
  }
  func.func @transform_0(%arg0: i32, %arg1: i32) -> (i32, i32, i32) {
    %c0_i32 = arith.constant 0 : i32
    %c0_i32_0 = arith.constant 0 : i32
    return %arg0, %c0_i32, %arg1 : i32, i32, i32
  }
  func.func @transform_1(%arg0: i32, %arg1: i32) -> (i32, i32, i32) {
    %c0_i32 = arith.constant 0 : i32
    %c0_i32_0 = arith.constant 0 : i32
    %c0_i32_1 = arith.constant 0 : i32
    return %arg0, %c0_i32, %c0_i32_0 : i32, i32, i32
  }
  func.func @transform_2(%arg0: i32, %arg1: i32) -> (i32, i32, i32) {
    %c0_i32 = arith.constant 0 : i32
    %c0_i32_0 = arith.constant 0 : i32
    %c0_i32_1 = arith.constant 0 : i32
    return %arg0, %c0_i32, %c0_i32_0 : i32, i32, i32
  }
  func.func @transform_3(%arg0: i32, %arg1: i32) -> (i32, i32) {
    %c0_i32 = arith.constant 0 : i32
    %c0_i32_0 = arith.constant 0 : i32
    %c0_i32_1 = arith.constant 0 : i32
    return %c0_i32, %c0_i32_0 : i32, i32
  }
  func.func @transform_4(%arg0: i32, %arg1: i32) -> (i32, i32) {
    %c0_i32 = arith.constant 0 : i32
    %c0_i32_0 = arith.constant 0 : i32
    %c0_i32_1 = arith.constant 0 : i32
    return %c0_i32, %c0_i32_0 : i32, i32
  }
  func.func @transform_5(%arg0: i32, %arg1: i32) -> (i32, i32, i32) {
    %c0_i32 = arith.constant 0 : i32
    %c0_i32_0 = arith.constant 0 : i32
    return %arg0, %c0_i32, %arg1 : i32, i32, i32
  }
}

</mosaic_0001>

<llo_original>
// kernel: tpu_custom_call.1
$region0: #{tpu_custom_call.1}
  #allocation0 [shape = 'u32[]', space=smem, size = 0x4, offset = 0x4, fixed_abs, tag = 'smem constant byte address 0x4 - core index']
  #allocation1 [shape = 'u32[144,128]{1,0:T(1,128)}', space=vmem, size = 0x12000, scoped, tag = 'internal scratch']
  %s0 = inlined_call_operand.hbm [shape: f32[2,32,64], index: 0, kind: input, shape index: {}]
  %s1 = inlined_call_operand.hbm [shape: f32[2,32,64], index: 1, kind: input, shape index: {}]
  %s2 = inlined_call_operand.hbm [shape: f32[2,32,64], index: 2, kind: input, shape index: {}]
  %s3 = inlined_call_operand.hbm [shape: f32[32,32], index: 3, kind: input, shape index: {}]
  %s4 = inlined_call_operand.vmem [shape: f32[1,32], index: 4, kind: input, shape index: {}]
  %s5 = inlined_call_operand.hbm [shape: f32[2,32,64], index: 5, kind: output, shape index: {}]
  %s6 = sld [smem:[#allocation0]]
  $region69: #{tpu_custom_call.1} parent=0
    _
  %s8 = ssub.s32 1, %s6
  %s9 = scalar_select 0, %s8, %s6
  $region1: #{tpu_custom_call.1} parent=0
    #allocation2 [shape = 'u8[32768]{0}', space=vmem, size = 0x8000, scoped, tag = 'input window, operand 0']
    #allocation3 [shape = 's32[2]{0}', space=sflag, size = 0x8, scoped, tag = 'scoped memory for tpu_custom_call.1']
    #allocation4 [shape = 's32[2]{0}', space=sflag, size = 0x8, scoped, tag = 'scoped memory for tpu_custom_call.1']
    #allocation5 [shape = 'u8[32768]{0}', space=vmem, size = 0x8000, scoped, tag = 'input window, operand 1']
    #allocation6 [shape = 's32[2]{0}', space=sflag, size = 0x8, scoped, tag = 'scoped memory for tpu_custom_call.1']
    #allocation7 [shape = 'u8[32768]{0}', space=vmem, size = 0x8000, scoped, tag = 'input window, operand 2']
    #allocation8 [shape = 'u8[16384]{0}', space=vmem, size = 0x4000, scoped, tag = 'input window, operand 3, single buffered']
    #allocation9 [shape = 's32[1]{0}', space=sflag, size = 0x4, scoped, tag = 'scoped memory for tpu_custom_call.1']
    #allocation10 [shape = 'u8[32768]{0}', space=vmem, size = 0x8000, scoped, tag = 'output window, operand 0']
    %10 = vsyncpa [#allocation3], 0
    %s11 = scalar_lea.sflag [#allocation3], 1
    %12 = vsyncpa %s11, 0
    %13 = vsyncpa [#allocation6], 0
    %s14 = scalar_lea.sflag [#allocation6], 1
    %15 = vsyncpa %s14, 0
    %16 = vsyncpa [#allocation9], 0
    %17 = vsyncpa [#allocation4], 0
    %s18 = scalar_lea.sflag [#allocation4], 1
    %19 = vsyncpa %s18, 0
    loop: start=0, step=1, limit=4
    $region2: #{tpu_custom_call.1} parent=1 // loop_pre_header
      _
    $region3: #{tpu_custom_call.1} parent=1 // loop_header
      %s21 = sphi 0, %s25
      %p22 = scmp.ge.s32.totalorder %s21, 4
      %s28 = sphi 0, %s40
      %s29 = sphi 0, %s36
      %s30 = sphi 0, %s28
      %s31 = sphi 0, %s29
      %s32 = sphi 0, %s30
      %s33 = sphi 0, %s31
      %s45 = sphi 0, %s47
      %s48 = sphi 0, %s45
      %s49 = sphi 0, %s48
      %s65 = sphi 0, %s49
      %s71 = sphi 0, %s73
      %s74 = sphi 0, %s71
      %s75 = sphi 0, %s74
      %s91 = sphi 0, %s75
      %s97 = sphi 0, %s99
      %s100 = sphi 0, %s97
      %s101 = sphi 0, %s100
      %s117 = sphi 0, %s101
      %s121 = sphi 0, %s121
      %s123 = sphi 0, %s121
      %s124 = sphi 0, %s123
      %s138 = sphi 0, %s124
      %s142 = sphi 0, %s142
      %s144 = sphi 0, %s142
      %s145 = sphi 0, %s144
      %s159 = sphi 0, %s145
      %s167 = sphi 0, %s169
      %s170 = sphi 0, %s167
      %s171 = sphi 0, %s170
      %s187 = sphi 0, %s171
    $region4: #{tpu_custom_call.1} parent=1 // loop_header_branch
      %24 = sbr.rel (%p22) target = $region8
    $region5: #{tpu_custom_call.1} parent=1 // loop_body
      %s26 = ssub.s32 %s21, 1
      %s27 = ssub.s32 %s21, 2
      %s34 = sadd.s32 1, %s29
      %p35 = scmp.ge.s32.totalorder %s34, 1
      %s36 = scalar_select %p35, 0, %s34
      %s37 = sadd.s32 1, %s28
      %s38 = scalar_select %p35, %s37, %s28
      %p39 = scmp.ge.s32.totalorder %s38, 2
      %s40 = scalar_select %p39, 0, %s38
      %s41 = ssub.s32 %s28, %s40
      %s42 = ssub.s32 %s29, %s36
      %s43 = sor.u32 %s41, %s42
      %p44 = scmp.eq.s32.totalorder %s43, 0
      %s46 = sadd.s32 %s45, 1
      %s47 = scalar_select %p44, %s45, %s46
      %p50 = pneg %p44
      %p51 = scmp.eq.s32.totalorder %s21, 1
      %p52 = por %p50, %p51
      %p53 = scmp.ne.s32.totalorder %s45, %s48
      %p54 = scmp.eq.s32.totalorder %s21, 0
      %p55 = por %p53, %p54
      %p56 = scmp.ne.s32.totalorder %s45, %s48
      %p57 = scmp.eq.s32.totalorder %s26, 1
      %p58 = por %p56, %p57
      %p59 = scmp.ne.s32.totalorder %s48, %s49
      %p60 = scmp.eq.s32.totalorder %s26, 0
      %p61 = por %p59, %p60
      %p62 = scmp.ne.s32.totalorder %s48, %s49
      %p63 = scmp.eq.s32.totalorder %s27, 1
      %p64 = por %p62, %p63
      %p66 = scmp.ne.s32.totalorder %s49, %s65
      %p67 = scmp.eq.s32.totalorder %s27, 0
      %p68 = por %p66, %p67
      %s69 = ssub.s32 %s28, %s40
      %p70 = scmp.eq.s32.totalorder %s69, 0
      %s72 = sadd.s32 %s71, 1
      %s73 = scalar_select %p70, %s71, %s72
      %p76 = pneg %p70
      %p77 = scmp.eq.s32.totalorder %s21, 1
      %p78 = por %p76, %p77
      %p79 = scmp.ne.s32.totalorder %s71, %s74
      %p80 = scmp.eq.s32.totalorder %s21, 0
      %p81 = por %p79, %p80
      %p82 = scmp.ne.s32.totalorder %s71, %s74
      %p83 = scmp.eq.s32.totalorder %s26, 1
      %p84 = por %p82, %p83
      %p85 = scmp.ne.s32.totalorder %s74, %s75
      %p86 = scmp.eq.s32.totalorder %s26, 0
      %p87 = por %p85, %p86
      %p88 = scmp.ne.s32.totalorder %s74, %s75
      %p89 = scmp.eq.s32.totalorder %s27, 1
      %p90 = por %p88, %p89
      %p92 = scmp.ne.s32.totalorder %s75, %s91
      %p93 = scmp.eq.s32.totalorder %s27, 0
      %p94 = por %p92, %p93
      %s95 = ssub.s32 %s28, %s40
      %p96 = scmp.eq.s32.totalorder %s95, 0
      %s98 = sadd.s32 %s97, 1
      %s99 = scalar_select %p96, %s97, %s98
      %p102 = pneg %p96
      %p103 = scmp.eq.s32.totalorder %s21, 1
      %p104 = por %p102, %p103
      %p105 = scmp.ne.s32.totalorder %s97, %s100
      %p106 = scmp.eq.s32.totalorder %s21, 0
      %p107 = por %p105, %p106
      %p108 = scmp.ne.s32.totalorder %s97, %s100
      %p109 = scmp.eq.s32.totalorder %s26, 1
      %p110 = por %p108, %p109
      %p111 = scmp.ne.s32.totalorder %s100, %s101
      %p112 = scmp.eq.s32.totalorder %s26, 0
      %p113 = por %p111, %p112
      %p114 = scmp.ne.s32.totalorder %s100, %s101
      %p115 = scmp.eq.s32.totalorder %s27, 1
      %p116 = por %p114, %p115
      %p118 = scmp.ne.s32.totalorder %s101, %s117
      %p119 = scmp.eq.s32.totalorder %s27, 0
      %p120 = por %p118, %p119
      %s122 = sadd.s32 %s121, 1
      %p125 = scmp.eq.s32.totalorder %s21, 1
      %p126 = scmp.ne.s32.totalorder %s121, %s123
      %p127 = scmp.eq.s32.totalorder %s21, 0
      %p128 = por %p126, %p127
      %p129 = scmp.ne.s32.totalorder %s121, %s123
      %p130 = scmp.eq.s32.totalorder %s26, 1
      %p131 = por %p129, %p130
      %p132 = scmp.ne.s32.totalorder %s123, %s124
      %p133 = scmp.eq.s32.totalorder %s26, 0
      %p134 = por %p132, %p133
      %p135 = scmp.ne.s32.totalorder %s123, %s124
      %p136 = scmp.eq.s32.totalorder %s27, 1
      %p137 = por %p135, %p136
      %p139 = scmp.ne.s32.totalorder %s124, %s138
      %p140 = scmp.eq.s32.totalorder %s27, 0
      %p141 = por %p139, %p140
      %s143 = sadd.s32 %s142, 1
      %p146 = scmp.eq.s32.totalorder %s21, 1
      %p147 = scmp.ne.s32.totalorder %s142, %s144
      %p148 = scmp.eq.s32.totalorder %s21, 0
      %p149 = por %p147, %p148
      %p150 = scmp.ne.s32.totalorder %s142, %s144
      %p151 = scmp.eq.s32.totalorder %s26, 1
      %p152 = por %p150, %p151
      %p153 = scmp.ne.s32.totalorder %s144, %s145
      %p154 = scmp.eq.s32.totalorder %s26, 0
      %p155 = por %p153, %p154
      %p156 = scmp.ne.s32.totalorder %s144, %s145
      %p157 = scmp.eq.s32.totalorder %s27, 1
      %p158 = por %p156, %p157
      %p160 = scmp.ne.s32.totalorder %s145, %s159
      %p161 = scmp.eq.s32.totalorder %s27, 0
      %p162 = por %p160, %p161
      %s163 = ssub.s32 %s28, %s40
      %s164 = ssub.s32 %s29, %s36
      %s165 = sor.u32 %s163, %s164
      %p166 = scmp.eq.s32.totalorder %s165, 0
      %s168 = sadd.s32 %s167, 1
      %s169 = scalar_select %p166, %s167, %s168
      %p172 = pneg %p166
      %p173 = scmp.eq.s32.totalorder %s21, 1
      %p174 = por %p172, %p173
      %p175 = scmp.ne.s32.totalorder %s167, %s170
      %p176 = scmp.eq.s32.totalorder %s21, 0
      %p177 = por %p175, %p176
      %p178 = scmp.ne.s32.totalorder %s167, %s170
      %p179 = scmp.eq.s32.totalorder %s26, 1
      %p180 = por %p178, %p179
      %p181 = scmp.ne.s32.totalorder %s170, %s171
      %p182 = scmp.eq.s32.totalorder %s26, 0
      %p183 = por %p181, %p182
      %p184 = scmp.ne.s32.totalorder %s170, %s171
      %p185 = scmp.eq.s32.totalorder %s27, 1
      %p186 = por %p184, %p185
      %p188 = scmp.ne.s32.totalorder %s171, %s187
      %p189 = scmp.eq.s32.totalorder %s27, 0
      %p190 = por %p188, %p189
      %p191 = scmp.le.s32.totalorder 1, %s21
      %p192 = scmp.lt.s32.totalorder %s21, 3
      %p193 = pnand %p191, %p192
      %p194 = pneg %p193
      // Predicated region
      $region9: #{tpu_custom_call.1} parent=5 // pred_check
        _
      $region10: #{tpu_custom_call.1} parent=5 // pred_check_branch
        %196 = sbr.rel (%p193) target = $region12
      $region11: #{tpu_custom_call.1} parent=5 // pred_region
        %s197 = ssub.s32 %s21, 1
        // Predicated region
        $region13: #{tpu_custom_call.1} parent=11 // pred_check
          %p198 = pneg %p134
        $region14: #{tpu_custom_call.1} parent=11 // pred_check_branch
          %200 = sbr.rel (%p198) target = $region16
        $region15: #{tpu_custom_call.1} parent=11 // pred_region
          %s202 = ssub.s32 512, 512
          %203 = vsyncadd [#allocation9], %s202
          %s204 = sshll.u32 [#allocation8], 4
          %s205 = int_to_ptr.vmem [resolvable:$true] %s204
          %210 = dma.hbm_to_vmem [thread:$0]  %s3, 512, %s205, [#allocation9], 128, 128, 8
        $region16: #{tpu_custom_call.1} parent=11 // pred_fallthru
          _
        // Predicated region
        $region17: #{tpu_custom_call.1} parent=11 // pred_check
          %p211 = pneg %p155
        $region18: #{tpu_custom_call.1} parent=11 // pred_check_branch
          %213 = sbr.rel (%p211) target = $region20
        $region19: #{tpu_custom_call.1} parent=11 // pred_region
          _
        $region20: #{tpu_custom_call.1} parent=11 // pred_fallthru
          _
      $region12: #{tpu_custom_call.1} parent=5 // pred_fallthru
        _
      %p214 = scmp.lt.s32.totalorder %s21, 2
      // Predicated region
      $region21: #{tpu_custom_call.1} parent=5 // pred_check
        %p215 = pneg %p214
      $region22: #{tpu_custom_call.1} parent=5 // pred_check_branch
        %217 = sbr.rel (%p215) target = $region24
      $region23: #{tpu_custom_call.1} parent=5 // pred_region
        // Predicated region
        $region25: #{tpu_custom_call.1} parent=23 // pred_check
          %p218 = pneg %p55
        $region26: #{tpu_custom_call.1} parent=23 // pred_check_branch
          %220 = sbr.rel (%p218) target = $region28
        $region27: #{tpu_custom_call.1} parent=23 // pred_region
          %s221 = sand.u32 %s45, 1
          %s222 = scalar_lea.sflag [#allocation3], %s221
          %s223 = sand.u32 %s45, 1
          %s224 = smul.addr %s223, 32
          %s225 = scalar_lea.vmem [#allocation2], %s224
          %s227 = ssub.s32 512, 512
          %228 = vsyncadd %s222, %s227
          %s229 = smul.addr %s28, 4
          %s230 = sadd.s32 %s29, %s229
          %s231 = smul.addr %s230, 128
          %s232 = scalar_lea.hbm %s0, %s231
          %s233 = sshll.u32 %s225, 4
          %s234 = int_to_ptr.vmem [resolvable:$true] %s233
          %239 = dma.hbm_to_vmem [thread:$0]  %s232, 512, %s234, %s222, 128, 128, 8
        $region28: #{tpu_custom_call.1} parent=23 // pred_fallthru
          _
        // Predicated region
        $region29: #{tpu_custom_call.1} parent=23 // pred_check
          %p240 = pneg %p81
        $region30: #{tpu_custom_call.1} parent=23 // pred_check_branch
          %242 = sbr.rel (%p240) target = $region32
        $region31: #{tpu_custom_call.1} parent=23 // pred_region
          %s243 = sand.u32 %s21, 1
          %s244 = scalar_lea.sflag [#allocation6], %s243
          %s245 = sand.u32 %s71, 1
          %s246 = smul.addr %s245, 32
          %s247 = scalar_lea.vmem [#allocation5], %s246
          %s249 = ssub.s32 512, 512
          %250 = vsyncadd %s244, %s249
          %s251 = smul.addr %s28, 4
          %s252 = smul.addr %s251, 128
          %s253 = scalar_lea.hbm %s1, %s252
          %s254 = sshll.u32 %s247, 4
          %s255 = int_to_ptr.vmem [resolvable:$true] %s254
          %260 = dma.hbm_to_vmem [thread:$0]  %s253, 512, %s255, %s244, 128, 128, 8
        $region32: #{tpu_custom_call.1} parent=23 // pred_fallthru
          _
        // Predicated region
        $region33: #{tpu_custom_call.1} parent=23 // pred_check
          %p261 = pneg %p107
        $region34: #{tpu_custom_call.1} parent=23 // pred_check_branch
          %263 = sbr.rel (%p261) target = $region36
        $region35: #{tpu_custom_call.1} parent=23 // pred_region
          %s264 = sand.u32 %s21, 1
          %s265 = scalar_lea.sflag [#allocation6], %s264
          %s266 = sand.u32 %s97, 1
          %s267 = smul.addr %s266, 32
          %s268 = scalar_lea.vmem [#allocation7], %s267
          %s270 = ssub.s32 512, 512
          %271 = vsyncadd %s265, %s270
          %s272 = smul.addr %s28, 4
          %s273 = smul.addr %s272, 128
          %s274 = scalar_lea.hbm %s2, %s273
          %s275 = sshll.u32 %s268, 4
          %s276 = int_to_ptr.vmem [resolvable:$true] %s275
          %281 = dma.hbm_to_vmem [thread:$0]  %s274, 512, %s276, %s265, 128, 128, 8
        $region36: #{tpu_custom_call.1} parent=23 // pred_fallthru
          _
      $region24: #{tpu_custom_call.1} parent=5 // pred_fallthru
        _
      %p282 = scmp.le.s32.totalorder 1, %s21
      %p283 = scmp.lt.s32.totalorder %s21, 3
      %p284 = pnand %p282, %p283
      %p285 = pneg %p284
      // Predicated region
      $region37: #{tpu_custom_call.1} parent=5 // pred_check
        _
      $region38: #{tpu_custom_call.1} parent=5 // pred_check_branch
        %287 = sbr.rel (%p284) target = $region40
      $region39: #{tpu_custom_call.1} parent=5 // pred_region
        %s288 = ssub.s32 %s21, 1
        %s289 = sand.u32 %s48, 1
        %s290 = scalar_lea.sflag [#allocation3], %s289
        %s291 = sand.u32 %s48, 1
        %s292 = smul.addr %s291, 32
        %s293 = scalar_lea.vmem [#allocation2], %s292
        // Predicated region
        $region41: #{tpu_custom_call.1} parent=39 // pred_check
          %p294 = pneg %p61
        $region42: #{tpu_custom_call.1} parent=39 // pred_check_branch
          %296 = sbr.rel (%p294) target = $region44
        $region43: #{tpu_custom_call.1} parent=39 // pred_region
          %297 = dma.done %s290, 512
        $region44: #{tpu_custom_call.1} parent=39 // pred_fallthru
          _
        %s298 = sand.u32 %s26, 1
        %s299 = scalar_lea.sflag [#allocation6], %s298
        %s300 = sand.u32 %s74, 1
        %s301 = smul.addr %s300, 32
        %s302 = scalar_lea.vmem [#allocation5], %s301
        // Predicated region
        $region45: #{tpu_custom_call.1} parent=39 // pred_check
          %p303 = pneg %p87
        $region46: #{tpu_custom_call.1} parent=39 // pred_check_branch
          %305 = sbr.rel (%p303) target = $region48
        $region47: #{tpu_custom_call.1} parent=39 // pred_region
          %306 = dma.done %s299, 512
        $region48: #{tpu_custom_call.1} parent=39 // pred_fallthru
          _
        %s307 = sand.u32 %s26, 1
        %s308 = scalar_lea.sflag [#allocation6], %s307
        %s309 = sand.u32 %s100, 1
        %s310 = smul.addr %s309, 32
        %s311 = scalar_lea.vmem [#allocation7], %s310
        // Predicated region
        $region49: #{tpu_custom_call.1} parent=39 // pred_check
          %p312 = pneg %p113
        $region50: #{tpu_custom_call.1} parent=39 // pred_check_branch
          %314 = sbr.rel (%p312) target = $region52
        $region51: #{tpu_custom_call.1} parent=39 // pred_region
          %315 = dma.done %s308, 512
        $region52: #{tpu_custom_call.1} parent=39 // pred_fallthru
          _
        // Predicated region
        $region53: #{tpu_custom_call.1} parent=39 // pred_check
          %p316 = pneg %p134
        $region54: #{tpu_custom_call.1} parent=39 // pred_check_branch
          %318 = sbr.rel (%p316) target = $region56
        $region55: #{tpu_custom_call.1} parent=39 // pred_region
          %319 = dma.done [#allocation9], 512
        $region56: #{tpu_custom_call.1} parent=39 // pred_fallthru
          _
        %s320 = sand.u32 %s48, 1
        %s321 = scalar_lea.sflag [#allocation3], %s320
        %s322 = sand.u32 %s48, 1
        %s323 = smul.addr %s322, 32
        %s324 = scalar_lea.vmem [#allocation2], %s323
        %p325 = pneg %p61
        %p326 = pneg %p58
        %s327 = sand.u32 %s26, 1
        %s328 = scalar_lea.sflag [#allocation6], %s327
        %s329 = sand.u32 %s74, 1
        %s330 = smul.addr %s329, 32
        %s331 = scalar_lea.vmem [#allocation5], %s330
        %p332 = pneg %p87
        %p333 = pneg %p84
        %s334 = sand.u32 %s26, 1
        %s335 = scalar_lea.sflag [#allocation6], %s334
        %s336 = sand.u32 %s100, 1
        %s337 = smul.addr %s336, 32
        %s338 = scalar_lea.vmem [#allocation7], %s337
        %p339 = pneg %p113
        %p340 = pneg %p110
        %p341 = pneg %p134
        %p342 = pneg %p131
        %p343 = pneg %p155
        %p344 = pneg %p152
        %p345 = pneg %p183
        %p346 = pneg %p180
        %s347 = sand.u32 %s170, 1
        %s348 = scalar_lea.sflag [#allocation4], %s347
        %s349 = sand.u32 %s170, 1
        %s350 = smul.addr %s349, 32
        %s351 = scalar_lea.vmem [#allocation10], %s350
        %v352 = vld [vmem:[%s293] sm:$0xff]
        %v353 = vld [vmem:[%s293 + $0x8] sm:$0xff]
        %v354 = vld [vmem:[%s293 + $0x10] sm:$0xff]
        %v355 = vld [vmem:[%s293 + $0x18] sm:$0xff]
        %v356 = vld [vmem:[%s302] sm:$0xff]
        %v357 = vld [vmem:[%s302 + $0x8] sm:$0xff]
        %v358 = vld [vmem:[%s302 + $0x10] sm:$0xff]
        %v359 = vld [vmem:[%s302 + $0x18] sm:$0xff]
        %v360 = vld [vmem:[%s311] sm:$0xff]
        %v361 = vld [vmem:[%s311 + $0x8] sm:$0xff]
        %v362 = vld [vmem:[%s311 + $0x10] sm:$0xff]
        %v363 = vld [vmem:[%s311 + $0x18] sm:$0xff]
        %364 = vxpose.xlu0.b32.start [1/16] %v352, 128
        %365 = vxpose.xlu0.b32.cont [2/16] %v353, 128
        %366 = vxpose.xlu0.b32.cont [3/16] %v354, 128
        %367 = vxpose.xlu0.b32.cont [4/16] %v355, 128
        %368 = vxpose.xlu0.b32.cont [5/16] 0.0, 128
        %369 = vxpose.xlu0.b32.cont [6/16] 0.0, 128
        %370 = vxpose.xlu0.b32.cont [7/16] 0.0, 128
        %371 = vxpose.xlu0.b32.cont [8/16] 0.0, 128
        %372 = vxpose.xlu0.b32.cont [9/16] 0.0, 128
        %373 = vxpose.xlu0.b32.cont [10/16] 0.0, 128
        %374 = vxpose.xlu0.b32.cont [11/16] 0.0, 128
        %375 = vxpose.xlu0.b32.cont [12/16] 0.0, 128
        %376 = vxpose.xlu0.b32.cont [13/16] 0.0, 128
        %377 = vxpose.xlu0.b32.cont [14/16] 0.0, 128
        %378 = vxpose.xlu0.b32.cont [15/16] 0.0, 128
        %379 = vxpose.xlu0.b32.end [16/16] 0.0, 128
        %v380 = vpop.trf.xlu0
        %v381 = vpop.trf.xlu0
        %v382 = vpop.trf.xlu0
        %v383 = vpop.trf.xlu0
        %v384 = vpop.trf.xlu0
        %v385 = vpop.trf.xlu0
        %v386 = vpop.trf.xlu0
        %v387 = vpop.trf.xlu0
        %v388 = vpop.trf.xlu0
        %v389 = vpop.trf.xlu0
        %v390 = vpop.trf.xlu0
        %v391 = vpop.trf.xlu0
        %v392 = vpop.trf.xlu0
        %v393 = vpop.trf.xlu0
        %v394 = vpop.trf.xlu0
        %v395 = vpop.trf.xlu0
        %v396 = vld [vmem:[#allocation8] sm:$0xff]
        %v397 = vld [vmem:[#allocation8 + $0x8] sm:$0xff]
        %v398 = vld [vmem:[#allocation8 + $0x10] sm:$0xff]
        %v399 = vld [vmem:[#allocation8 + $0x18] sm:$0xff]
        %v400 = vld [vmem:[%s4] sm:$0x1]
        %v402 = vlaneseq
        %v403 = vshrl.u32 %v402, 7
        %v404 = vsub.s32 0, %v403
        %v405 = vrot.slane %v400, %v404
        %vm407 = vcmask 261120
        %v409 = vsel %vm407, %v380, 0
        %v412 = vsel %vm407, %v381, 0
        %v415 = vsel %vm407, %v382, 0
        %v418 = vsel %vm407, %v383, 0
        %v421 = vsel %vm407, %v384, 0
        %v424 = vsel %vm407, %v385, 0
        %v427 = vsel %vm407, %v386, 0
        %v430 = vsel %vm407, %v387, 0
        %432 = vmatprep.subr.mxu0 0.0
        %433 = vmatpush1.msra.mxu0 %v396
        %434 = vmatprep.subr.mxu0 0.0
        %435 = vmatpush1.msra.mxu0 %v397
        %436 = vmatprep.subr.mxu0 0.0
        %437 = vmatpush1.msra.mxu0 %v398
        %438 = vmatprep.subr.mxu0 0.0
        %439 = vmatpush1.msra.mxu0 %v399
        %440 = vmatprep.subr.mxu0 0.0
        %441 = vmatpush1.msra.mxu0 0.0
        %442 = vmatprep.subr.mxu0 0.0
        %443 = vmatpush1.msra.mxu0 0.0
        %444 = vmatprep.subr.mxu0 0.0
        %445 = vmatpush1.msra.mxu0 0.0
        %446 = vmatprep.subr.mxu0 0.0
        %447 = vmatpush1.msra.mxu0 0.0
        %448 = vmatprep.subr.mxu0 0.0
        %449 = vmatpush1.msra.mxu0 0.0
        %450 = vmatprep.subr.mxu0 0.0
        %451 = vmatpush1.msra.mxu0 0.0
        %452 = vmatprep.subr.mxu0 0.0
        %453 = vmatpush1.msra.mxu0 0.0
        %454 = vmatprep.subr.mxu0 0.0
        %455 = vmatpush1.msra.mxu0 0.0
        %456 = vmatprep.subr.mxu0 0.0
        %457 = vmatpush1.msra.mxu0 0.0
        %458 = vmatprep.subr.mxu0 0.0
        %459 = vmatpush1.msra.mxu0 0.0
        %460 = vmatprep.subr.mxu0 0.0
        %461 = vmatpush1.msra.mxu0 0.0
        %462 = vmatprep.subr.mxu0 0.0
        %463 = vmatpush1.msra.mxu0 0.0
        %464 = vmatprep.subr.mxu0 0.0
        %465 = vmatpush1.msra.mxu0 0.0
        %466 = vmatprep.subr.mxu0 0.0
        %467 = vmatpush1.msra.mxu0 0.0
        %468 = vmatprep.subr.mxu0 0.0
        %469 = vmatpush1.msra.mxu0 0.0
        %470 = vmatprep.subr.mxu0 0.0
        %471 = vmatpush1.msra.mxu0 0.0
        %472 = vmatprep.subr.mxu0 0.0
        %473 = vmatpush1.msra.mxu0 0.0
        %474 = vmatprep.subr.mxu0 0.0
        %475 = vmatpush1.msra.mxu0 0.0
        %476 = vmatprep.subr.mxu0 0.0
        %477 = vmatpush1.msra.mxu0 0.0
        %478 = vmatprep.subr.mxu0 0.0
        %479 = vmatpush1.msra.mxu0 0.0
        %480 = vmatprep.subr.mxu0 0.0
        %481 = vmatpush1.msra.mxu0 0.0
        %482 = vmatprep.subr.mxu0 0.0
        %483 = vmatpush1.msra.mxu0 0.0
        %484 = vmatprep.subr.mxu0 0.0
        %485 = vmatpush1.msra.mxu0 0.0
        %486 = vmatprep.subr.mxu0 0.0
        %487 = vmatpush1.msra.mxu0 0.0
        %488 = vmatprep.subr.mxu0 0.0
        %489 = vmatpush1.msra.mxu0 0.0
        %490 = vmatprep.subr.mxu0 0.0
        %491 = vmatpush1.msra.mxu0 0.0
        %492 = vmatprep.subr.mxu0 0.0
        %493 = vmatpush1.msra.mxu0 0.0
        %494 = vmatprep.subr.mxu0 0.0
        %495 = vmatpush1.msra.mxu0 0.0
        %496 = vmatprep.mubr.f32.mxu0 0.0
        %497 = vmatmul.mubr.f32.gmra.mrb[0].mxu0 %v409
        %v498 = vpop.f32.mrb[0].mxu0
        %v499 = vadd.f32 %v405, %v498
        %v500 = vpop.f32.mrb[0].mxu0
        %501 = vmatprep.mubr.f32.mxu0 0.0
        %502 = vmatmul.mubr.f32.gmra.mrb[0].mxu0 %v412
        %v503 = vpop.f32.mrb[0].mxu0
        %v504 = vadd.f32 %v405, %v503
        %v505 = vpop.f32.mrb[0].mxu0
        %506 = vmatprep.mubr.f32.mxu0 0.0
        %507 = vmatmul.mubr.f32.gmra.mrb[0].mxu0 %v415
        %v508 = vpop.f32.mrb[0].mxu0
        %v509 = vadd.f32 %v405, %v508
        %v510 = vpop.f32.mrb[0].mxu0
        %511 = vmatprep.mubr.f32.mxu0 0.0
        %512 = vmatmul.mubr.f32.gmra.mrb[0].mxu0 %v418
        %v513 = vpop.f32.mrb[0].mxu0
        %v514 = vadd.f32 %v405, %v513
        %v515 = vpop.f32.mrb[0].mxu0
        %516 = vmatprep.mubr.f32.mxu0 0.0
        %517 = vmatmul.mubr.f32.gmra.mrb[0].mxu0 %v421
        %v518 = vpop.f32.mrb[0].mxu0
        %v519 = vadd.f32 %v405, %v518
        %v520 = vpop.f32.mrb[0].mxu0
        %521 = vmatprep.mubr.f32.mxu0 0.0
        %522 = vmatmul.mubr.f32.gmra.mrb[0].mxu0 %v424
        %v523 = vpop.f32.mrb[0].mxu0
        %v524 = vadd.f32 %v405, %v523
        %v525 = vpop.f32.mrb[0].mxu0
        %526 = vmatprep.mubr.f32.mxu0 0.0
        %527 = vmatmul.mubr.f32.gmra.mrb[0].mxu0 %v427
        %v528 = vpop.f32.mrb[0].mxu0
        %v529 = vadd.f32 %v405, %v528
        %v530 = vpop.f32.mrb[0].mxu0
        %531 = vmatprep.mubr.f32.mxu0 0.0
        %532 = vmatmul.mubr.f32.gmra.mrb[0].mxu0 %v430
        %v533 = vpop.f32.mrb[0].mxu0
        %v534 = vadd.f32 %v405, %v533
        %v535 = vpop.f32.mrb[0].mxu0
        %536 = vdwg.mxu0
        %v538 = vsel %vm407, %v499, 0
        %v541 = vsel %vm407, %v504, 0
        %v544 = vsel %vm407, %v509, 0
        %v547 = vsel %vm407, %v514, 0
        %v550 = vsel %vm407, %v519, 0
        %v553 = vsel %vm407, %v524, 0
        %v556 = vsel %vm407, %v529, 0
        %v559 = vsel %vm407, %v534, 0
        %561 = vmatprep.subr.mxu0 0.0
        %562 = vmatpush1.msra.mxu0 %v356
        %563 = vmatprep.subr.mxu0 0.0
        %564 = vmatpush1.msra.mxu0 %v357
        %565 = vmatprep.subr.mxu0 0.0
        %566 = vmatpush1.msra.mxu0 %v358
        %567 = vmatprep.subr.mxu0 0.0
        %568 = vmatpush1.msra.mxu0 %v359
        %569 = vmatprep.subr.mxu0 0.0
        %570 = vmatpush1.msra.mxu0 0.0
        %571 = vmatprep.subr.mxu0 0.0
        %572 = vmatpush1.msra.mxu0 0.0
        %573 = vmatprep.subr.mxu0 0.0
        %574 = vmatpush1.msra.mxu0 0.0
        %575 = vmatprep.subr.mxu0 0.0
        %576 = vmatpush1.msra.mxu0 0.0
        %577 = vmatprep.subr.mxu0 0.0
        %578 = vmatpush1.msra.mxu0 0.0
        %579 = vmatprep.subr.mxu0 0.0
        %580 = vmatpush1.msra.mxu0 0.0
        %581 = vmatprep.subr.mxu0 0.0
        %582 = vmatpush1.msra.mxu0 0.0
        %583 = vmatprep.subr.mxu0 0.0
        %584 = vmatpush1.msra.mxu0 0.0
        %585 = vmatprep.subr.mxu0 0.0
        %586 = vmatpush1.msra.mxu0 0.0
        %587 = vmatprep.subr.mxu0 0.0
        %588 = vmatpush1.msra.mxu0 0.0
        %589 = vmatprep.subr.mxu0 0.0
        %590 = vmatpush1.msra.mxu0 0.0
        %591 = vmatprep.subr.mxu0 0.0
        %592 = vmatpush1.msra.mxu0 0.0
        %593 = vmatprep.subr.mxu0 0.0
        %594 = vmatpush1.msra.mxu0 0.0
        %595 = vmatprep.subr.mxu0 0.0
        %596 = vmatpush1.msra.mxu0 0.0
        %597 = vmatprep.subr.mxu0 0.0
        %598 = vmatpush1.msra.mxu0 0.0
        %599 = vmatprep.subr.mxu0 0.0
        %600 = vmatpush1.msra.mxu0 0.0
        %601 = vmatprep.subr.mxu0 0.0
        %602 = vmatpush1.msra.mxu0 0.0
        %603 = vmatprep.subr.mxu0 0.0
        %604 = vmatpush1.msra.mxu0 0.0
        %605 = vmatprep.subr.mxu0 0.0
        %606 = vmatpush1.msra.mxu0 0.0
        %607 = vmatprep.subr.mxu0 0.0
        %608 = vmatpush1.msra.mxu0 0.0
        %609 = vmatprep.subr.mxu0 0.0
        %610 = vmatpush1.msra.mxu0 0.0
        %611 = vmatprep.subr.mxu0 0.0
        %612 = vmatpush1.msra.mxu0 0.0
        %613 = vmatprep.subr.mxu0 0.0
        %614 = vmatpush1.msra.mxu0 0.0
        %615 = vmatprep.subr.mxu0 0.0
        %616 = vmatpush1.msra.mxu0 0.0
        %617 = vmatprep.subr.mxu0 0.0
        %618 = vmatpush1.msra.mxu0 0.0
        %619 = vmatprep.subr.mxu0 0.0
        %620 = vmatpush1.msra.mxu0 0.0
        %621 = vmatprep.subr.mxu0 0.0
        %622 = vmatpush1.msra.mxu0 0.0
        %623 = vmatprep.subr.mxu0 0.0
        %624 = vmatpush1.msra.mxu0 0.0
        %625 = vmatprep.mubr.f32.mxu0 0.0
        %626 = vmatmul.mubr.f32.gmra.mrb[0].mxu0 %v538
        %v627 = vpop.f32.mrb[0].mxu0
        %v628 = vadd.f32 0.0, %v627
        %v629 = vpop.f32.mrb[0].mxu0
        %630 = vmatprep.mubr.f32.mxu0 0.0
        %631 = vmatmul.mubr.f32.gmra.mrb[0].mxu0 %v541
        %v632 = vpop.f32.mrb[0].mxu0
        %v633 = vadd.f32 0.0, %v632
        %v634 = vpop.f32.mrb[0].mxu0
        %635 = vmatprep.mubr.f32.mxu0 0.0
        %636 = vmatmul.mubr.f32.gmra.mrb[0].mxu0 %v544
        %v637 = vpop.f32.mrb[0].mxu0
        %v638 = vadd.f32 0.0, %v637
        %v639 = vpop.f32.mrb[0].mxu0
        %640 = vmatprep.mubr.f32.mxu0 0.0
        %641 = vmatmul.mubr.f32.gmra.mrb[0].mxu0 %v547
        %v642 = vpop.f32.mrb[0].mxu0
        %v643 = vadd.f32 0.0, %v642
        %v644 = vpop.f32.mrb[0].mxu0
        %645 = vmatprep.mubr.f32.mxu0 0.0
        %646 = vmatmul.mubr.f32.gmra.mrb[0].mxu0 %v550
        %v647 = vpop.f32.mrb[0].mxu0
        %v648 = vadd.f32 0.0, %v647
        %v649 = vpop.f32.mrb[0].mxu0
        %650 = vmatprep.mubr.f32.mxu0 0.0
        %651 = vmatmul.mubr.f32.gmra.mrb[0].mxu0 %v553
        %v652 = vpop.f32.mrb[0].mxu0
        %v653 = vadd.f32 0.0, %v652
        %v654 = vpop.f32.mrb[0].mxu0
        %655 = vmatprep.mubr.f32.mxu0 0.0
        %656 = vmatmul.mubr.f32.gmra.mrb[0].mxu0 %v556
        %v657 = vpop.f32.mrb[0].mxu0
        %v658 = vadd.f32 0.0, %v657
        %v659 = vpop.f32.mrb[0].mxu0
        %660 = vmatprep.mubr.f32.mxu0 0.0
        %661 = vmatmul.mubr.f32.gmra.mrb[0].mxu0 %v559
        %v662 = vpop.f32.mrb[0].mxu0
        %v663 = vadd.f32 0.0, %v662
        %v664 = vpop.f32.mrb[0].mxu0
        %665 = vdwg.mxu0
        %vm666 = vcmask 523264
        %v667 = vsel %vm666, %v628, -inf
        %668 = vmax.xlane.f32.xlu0 %v667
        %v669 = vpop.xlane.xlu0 %668
        %v670 = vsel %vm666, %v633, -inf
        %671 = vmax.xlane.f32.xlu0 %v670
        %v672 = vpop.xlane.xlu0 %671
        %v673 = vsel %vm666, %v638, -inf
        %674 = vmax.xlane.f32.xlu0 %v673
        %v675 = vpop.xlane.xlu0 %674
        %v676 = vsel %vm666, %v643, -inf
        %677 = vmax.xlane.f32.xlu0 %v676
        %v678 = vpop.xlane.xlu0 %677
        %v679 = vsel %vm666, %v648, -inf
        %680 = vmax.xlane.f32.xlu0 %v679
        %v681 = vpop.xlane.xlu0 %680
        %v682 = vsel %vm666, %v653, -inf
        %683 = vmax.xlane.f32.xlu0 %v682
        %v684 = vpop.xlane.xlu0 %683
        %v685 = vsel %vm666, %v658, -inf
        %686 = vmax.xlane.f32.xlu0 %v685
        %v687 = vpop.xlane.xlu0 %686
        %v688 = vsel %vm666, %v663, -inf
        %689 = vmax.xlane.f32.xlu0 %v688
        %v690 = vpop.xlane.xlu0 %689
        %v691 = vsub.f32 %v628, %v669
        %v692 = vsub.f32 %v633, %v672
        %v693 = vsub.f32 %v638, %v675
        %v694 = vsub.f32 %v643, %v678
        %v695 = vsub.f32 %v648, %v681
        %v696 = vsub.f32 %v653, %v684
        %v697 = vsub.f32 %v658, %v687
        %v698 = vsub.f32 %v663, %v690
        %v699 = vmul.f32 %v691, 1.442695
        %v700 = vpow.pop %v699
        %v701 = vmul.f32 %v692, 1.442695
        %v702 = vpow.pop %v701
        %v703 = vmul.f32 %v693, 1.442695
        %v704 = vpow.pop %v703
        %v705 = vmul.f32 %v694, 1.442695
        %v706 = vpow.pop %v705
        %v707 = vmul.f32 %v695, 1.442695
        %v708 = vpow.pop %v707
        %v709 = vmul.f32 %v696, 1.442695
        %v710 = vpow.pop %v709
        %v711 = vmul.f32 %v697, 1.442695
        %v712 = vpow.pop %v711
        %v713 = vmul.f32 %v698, 1.442695
        %v714 = vpow.pop %v713
        %v715 = vsel %vm666, %v700, 0.0
        %716 = vadd.xlane.f32.xlu0 %v715
        %v717 = vpop.xlane.xlu0 %716
        %v718 = vsel %vm666, %v702, 0.0
        %719 = vadd.xlane.f32.xlu0 %v718
        %v720 = vpop.xlane.xlu0 %719
        %v721 = vsel %vm666, %v704, 0.0
        %722 = vadd.xlane.f32.xlu0 %v721
        %v723 = vpop.xlane.xlu0 %722
        %v724 = vsel %vm666, %v706, 0.0
        %725 = vadd.xlane.f32.xlu0 %v724
        %v726 = vpop.xlane.xlu0 %725
        %v727 = vsel %vm666, %v708, 0.0
        %728 = vadd.xlane.f32.xlu0 %v727
        %v729 = vpop.xlane.xlu0 %728
        %v730 = vsel %vm666, %v710, 0.0
        %731 = vadd.xlane.f32.xlu0 %v730
        %v732 = vpop.xlane.xlu0 %731
        %v733 = vsel %vm666, %v712, 0.0
        %734 = vadd.xlane.f32.xlu0 %v733
        %v735 = vpop.xlane.xlu0 %734
        %v736 = vsel %vm666, %v714, 0.0
        %737 = vadd.xlane.f32.xlu0 %v736
        %v738 = vpop.xlane.xlu0 %737
        %v740 = vsel %vm666, %v700, 0
        %v743 = vsel %vm666, %v702, 0
        %v746 = vsel %vm666, %v704, 0
        %v749 = vsel %vm666, %v706, 0
        %v752 = vsel %vm666, %v708, 0
        %v755 = vsel %vm666, %v710, 0
        %v758 = vsel %vm666, %v712, 0
        %v761 = vsel %vm666, %v714, 0
        %v764 = vsel %vm666, %v360, 0
        %v767 = vsel %vm666, %v361, 0
        %v770 = vsel %vm666, %v362, 0
        %v773 = vsel %vm666, %v363, 0
        %775 = vmatprep.subr.mxu0 0.0
        %776 = vmatpush1.xpose.msra.mxu0 %v764
        %777 = vmatprep.subr.mxu0 0.0
        %778 = vmatpush1.xpose.msra.mxu0 %v767
        %779 = vmatprep.subr.mxu0 0.0
        %780 = vmatpush1.xpose.msra.mxu0 %v770
        %781 = vmatprep.subr.mxu0 0.0
        %782 = vmatpush1.xpose.msra.mxu0 %v773
        %783 = vmatprep.subr.mxu0 0.0
        %784 = vmatpush1.xpose.msra.mxu0 0.0
        %785 = vmatprep.subr.mxu0 0.0
        %786 = vmatpush1.xpose.msra.mxu0 0.0
        %787 = vmatprep.subr.mxu0 0.0
        %788 = vmatpush1.xpose.msra.mxu0 0.0
        %789 = vmatprep.subr.mxu0 0.0
        %790 = vmatpush1.xpose.msra.mxu0 0.0
        %791 = vmatprep.subr.mxu0 0.0
        %792 = vmatpush1.xpose.msra.mxu0 0.0
        %793 = vmatprep.subr.mxu0 0.0
        %794 = vmatpush1.xpose.msra.mxu0 0.0
        %795 = vmatprep.subr.mxu0 0.0
        %796 = vmatpush1.xpose.msra.mxu0 0.0
        %797 = vmatprep.subr.mxu0 0.0
        %798 = vmatpush1.xpose.msra.mxu0 0.0
        %799 = vmatprep.subr.mxu0 0.0
        %800 = vmatpush1.xpose.msra.mxu0 0.0
        %801 = vmatprep.subr.mxu0 0.0
        %802 = vmatpush1.xpose.msra.mxu0 0.0
        %803 = vmatprep.subr.mxu0 0.0
        %804 = vmatpush1.xpose.msra.mxu0 0.0
        %805 = vmatprep.subr.mxu0 0.0
        %806 = vmatpush1.xpose.msra.mxu0 0.0
        %807 = vmatprep.subr.mxu0 0.0
        %808 = vmatpush1.xpose.msra.mxu0 0.0
        %809 = vmatprep.subr.mxu0 0.0
        %810 = vmatpush1.xpose.msra.mxu0 0.0
        %811 = vmatprep.subr.mxu0 0.0
        %812 = vmatpush1.xpose.msra.mxu0 0.0
        %813 = vmatprep.subr.mxu0 0.0
        %814 = vmatpush1.xpose.msra.mxu0 0.0
        %815 = vmatprep.subr.mxu0 0.0
        %816 = vmatpush1.xpose.msra.mxu0 0.0
        %817 = vmatprep.subr.mxu0 0.0
        %818 = vmatpush1.xpose.msra.mxu0 0.0
        %819 = vmatprep.subr.mxu0 0.0
        %820 = vmatpush1.xpose.msra.mxu0 0.0
        %821 = vmatprep.subr.mxu0 0.0
        %822 = vmatpush1.xpose.msra.mxu0 0.0
        %823 = vmatprep.subr.mxu0 0.0
        %824 = vmatpush1.xpose.msra.mxu0 0.0
        %825 = vmatprep.subr.mxu0 0.0
        %826 = vmatpush1.xpose.msra.mxu0 0.0
        %827 = vmatprep.subr.mxu0 0.0
        %828 = vmatpush1.xpose.msra.mxu0 0.0
        %829 = vmatprep.subr.mxu0 0.0
        %830 = vmatpush1.xpose.msra.mxu0 0.0
        %831 = vmatprep.subr.mxu0 0.0
        %832 = vmatpush1.xpose.msra.mxu0 0.0
        %833 = vmatprep.subr.mxu0 0.0
        %834 = vmatpush1.xpose.msra.mxu0 0.0
        %835 = vmatprep.subr.mxu0 0.0
        %836 = vmatpush1.xpose.msra.mxu0 0.0
        %837 = vmatprep.subr.mxu0 0.0
        %838 = vmatpush1.xpose.msra.mxu0 0.0
        %839 = vmatprep.mubr.f32.mxu0 0.0
        %840 = vmatmul.mubr.f32.gmra.mrb[0].mxu0 %v740
        %v841 = vpop.f32.mrb[0].mxu0
        %v842 = vadd.f32 0.0, %v841
        %v843 = vpop.f32.mrb[0].mxu0
        %844 = vmatprep.mubr.f32.mxu0 0.0
        %845 = vmatmul.mubr.f32.gmra.mrb[0].mxu0 %v743
        %v846 = vpop.f32.mrb[0].mxu0
        %v847 = vadd.f32 0.0, %v846
        %v848 = vpop.f32.mrb[0].mxu0
        %849 = vmatprep.mubr.f32.mxu0 0.0
        %850 = vmatmul.mubr.f32.gmra.mrb[0].mxu0 %v746
        %v851 = vpop.f32.mrb[0].mxu0
        %v852 = vadd.f32 0.0, %v851
        %v853 = vpop.f32.mrb[0].mxu0
        %854 = vmatprep.mubr.f32.mxu0 0.0
        %855 = vmatmul.mubr.f32.gmra.mrb[0].mxu0 %v749
        %v856 = vpop.f32.mrb[0].mxu0
        %v857 = vadd.f32 0.0, %v856
        %v858 = vpop.f32.mrb[0].mxu0
        %859 = vmatprep.mubr.f32.mxu0 0.0
        %860 = vmatmul.mubr.f32.gmra.mrb[0].mxu0 %v752
        %v861 = vpop.f32.mrb[0].mxu0
        %v862 = vadd.f32 0.0, %v861
        %v863 = vpop.f32.mrb[0].mxu0
        %864 = vmatprep.mubr.f32.mxu0 0.0
        %865 = vmatmul.mubr.f32.gmra.mrb[0].mxu0 %v755
        %v866 = vpop.f32.mrb[0].mxu0
        %v867 = vadd.f32 0.0, %v866
        %v868 = vpop.f32.mrb[0].mxu0
        %869 = vmatprep.mubr.f32.mxu0 0.0
        %870 = vmatmul.mubr.f32.gmra.mrb[0].mxu0 %v758
        %v871 = vpop.f32.mrb[0].mxu0
        %v872 = vadd.f32 0.0, %v871
        %v873 = vpop.f32.mrb[0].mxu0
        %874 = vmatprep.mubr.f32.mxu0 0.0
        %875 = vmatmul.mubr.f32.gmra.mrb[0].mxu0 %v761
        %v876 = vpop.f32.mrb[0].mxu0
        %v877 = vadd.f32 0.0, %v876
        %v878 = vpop.f32.mrb[0].mxu0
        %879 = vdwg.mxu0
        %v880 = vrcp.pop %v717
        %v881 = vrcp.pop %v720
        %v882 = vrcp.pop %v723
        %v883 = vrcp.pop %v726
        %v884 = vrcp.pop %v729
        %v885 = vrcp.pop %v732
        %v886 = vrcp.pop %v735
        %v887 = vrcp.pop %v738
        %v888 = vmul.f32 %v842, %v880
        %v889 = vmul.f32 %v847, %v881
        %v890 = vmul.f32 %v852, %v882
        %v891 = vmul.f32 %v857, %v883
        %v892 = vmul.f32 %v862, %v884
        %v893 = vmul.f32 %v867, %v885
        %v894 = vmul.f32 %v872, %v886
        %v895 = vmul.f32 %v877, %v887
        %896 = vxpose.xlu0.b32.start [1/16] %v888, 128
        %897 = vxpose.xlu0.b32.cont [2/16] %v889, 128
        %898 = vxpose.xlu0.b32.cont [3/16] %v890, 128
        %899 = vxpose.xlu0.b32.cont [4/16] %v891, 128
        %900 = vxpose.xlu0.b32.cont [5/16] %v892, 128
        %901 = vxpose.xlu0.b32.cont [6/16] %v893, 128
        %902 = vxpose.xlu0.b32.cont [7/16] %v894, 128
        %903 = vxpose.xlu0.b32.cont [8/16] %v895, 128
        %904 = vxpose.xlu0.b32.cont [9/16] 0.0, 128
        %905 = vxpose.xlu0.b32.cont [10/16] 0.0, 128
        %906 = vxpose.xlu0.b32.cont [11/16] 0.0, 128
        %907 = vxpose.xlu0.b32.cont [12/16] 0.0, 128
        %908 = vxpose.xlu0.b32.cont [13/16] 0.0, 128
        %909 = vxpose.xlu0.b32.cont [14/16] 0.0, 128
        %910 = vxpose.xlu0.b32.cont [15/16] 0.0, 128
        %911 = vxpose.xlu0.b32.end [16/16] 0.0, 128
        %v912 = vpop.trf.xlu0
        %v913 = vpop.trf.xlu0
        %v914 = vpop.trf.xlu0
        %v915 = vpop.trf.xlu0
        %v916 = vpop.trf.xlu0
        %v917 = vpop.trf.xlu0
        %v918 = vpop.trf.xlu0
        %v919 = vpop.trf.xlu0
        %v920 = vpop.trf.xlu0
        %v921 = vpop.trf.xlu0
        %v922 = vpop.trf.xlu0
        %v923 = vpop.trf.xlu0
        %v924 = vpop.trf.xlu0
        %v925 = vpop.trf.xlu0
        %v926 = vpop.trf.xlu0
        %v927 = vpop.trf.xlu0
        %v928 = vadd.f32 %v912, %v352
        %v929 = vadd.f32 %v913, %v353
        %v930 = vadd.f32 %v914, %v354
        %v931 = vadd.f32 %v915, %v355
        %932 = vst.msk [vmem:[%s351] sm:$0xff] %vm666, %v928
        %933 = vst.msk [vmem:[%s351 + $0x8] sm:$0xff] %vm666, %v929
        %934 = vst.msk [vmem:[%s351 + $0x10] sm:$0xff] %vm666, %v930
        %935 = vst.msk [vmem:[%s351 + $0x18] sm:$0xff] %vm666, %v931
        %s936 = sand.u32 %s170, 1
        %s937 = scalar_lea.sflag [#allocation4], %s936
        %s938 = sand.u32 %s170, 1
        %s939 = smul.addr %s938, 32
        %s940 = scalar_lea.vmem [#allocation10], %s939
        // Predicated region
        $region57: #{tpu_custom_call.1} parent=39 // pred_check
          %p941 = pneg %p180
        $region58: #{tpu_custom_call.1} parent=39 // pred_check_branch
          %943 = sbr.rel (%p941) target = $region60
        $region59: #{tpu_custom_call.1} parent=39 // pred_region
          %s945 = ssub.s32 512, 512
          %946 = vsyncadd %s937, %s945
          %s947 = smul.addr %s30, 4
          %s948 = sadd.s32 %s31, %s947
          %s949 = smul.addr %s948, 128
          %s950 = scalar_lea.hbm %s5, %s949
          %s951 = sshll.u32 %s940, 4
          %s952 = int_to_ptr.vmem [resolvable:$true] %s951
          %957 = dma.vmem_to_hbm [thread:$0]  %s952, 512, %s950, %s937, 128, 128, 8
        $region60: #{tpu_custom_call.1} parent=39 // pred_fallthru
          _
      $region40: #{tpu_custom_call.1} parent=5 // pred_fallthru
        _
      %p958 = scmp.le.s32.totalorder 2, %s21
      // Predicated region
      $region61: #{tpu_custom_call.1} parent=5 // pred_check
        %p959 = pneg %p958
      $region62: #{tpu_custom_call.1} parent=5 // pred_check_branch
        %961 = sbr.rel (%p959) target = $region64
      $region63: #{tpu_custom_call.1} parent=5 // pred_region
        %s962 = ssub.s32 %s21, 2
        // Predicated region
        $region65: #{tpu_custom_call.1} parent=63 // pred_check
          %p963 = pneg %p186
        $region66: #{tpu_custom_call.1} parent=63 // pred_check_branch
          %965 = sbr.rel (%p963) target = $region68
        $region67: #{tpu_custom_call.1} parent=63 // pred_region
          %s966 = sand.u32 %s171, 1
          %s967 = scalar_lea.sflag [#allocation4], %s966
          %s968 = sand.u32 %s171, 1
          %s969 = smul.addr %s968, 32
          %s970 = scalar_lea.vmem [#allocation10], %s969
          %971 = dma.done %s967, 512
        $region68: #{tpu_custom_call.1} parent=63 // pred_fallthru
          _
      $region64: #{tpu_custom_call.1} parent=5 // pred_fallthru
        _
    $region6: #{tpu_custom_call.1} parent=1 // loop_footer
      %s25 = sadd.s32 1, %s21
    $region7: #{tpu_custom_call.1} parent=1 // loop_footer_branch
      %20 = sbr.rel target = $region3
    $region8: #{tpu_custom_call.1} parent=1 // loop_exit
      _
    %972 = vsyncpa [#allocation3], 1
    %s973 = scalar_lea.sflag [#allocation3], 1
    %974 = vsyncpa %s973, 1
    %975 = vsyncpa [#allocation6], 1
    %s976 = scalar_lea.sflag [#allocation6], 1
    %977 = vsyncpa %s976, 1
    %978 = vsyncpa [#allocation9], 1
    %979 = vsyncpa [#allocation4], 1
    %s980 = scalar_lea.sflag [#allocation4], 1
    %981 = vsyncpa %s980, 1

</llo_original>
